<compile_context>
chip_gen: v5e
topology: v5e:2x2
jax: 0.10.0
libtpu: 0.0.40
codegen_flags: <defaults>
</compile_context>

<pallas_src>
import jax
import jax.numpy as jnp
from jax import lax
from jax.experimental import pallas as pl
from jax.experimental.pallas import tpu as pltpu


def _round_up(x: int, m: int) -> int:
    return ((x + m - 1) // m) * m


_CHUNK = 64  # rows per accumulation slab in the reg kernel (8 f32 vregs)


# --------------------------- predict (scores) kernel ------------------------

def _make_predict_kernel(bp):
    def kernel(ids_ref, user_hbm, itT_ref, o_ref, u_vmem, sems):
        # ids_ref : (bp,) int32 in SMEM (scalar-prefetched user ids)
        # user_hbm: (user_num, D) f32, left in HBM (memory_space=pl.ANY)
        # itT_ref : (D, tn) bf16 pre-transposed item-embedding tile
        # o_ref   : (bp, tn) f32 scores tile (items on the lane axis)
        # u_vmem  : (bp, D) f32 scratch holding the gathered user rows
        # sems    : (bp,) DMA semaphores

        # Gather the requested user rows HBM -> VMEM once, at the first grid
        # step; the scratch stays resident for all subsequent item tiles.
        @pl.when(pl.program_id(0) == 0)
        def _():
            copies = []
            for b in range(bp):                       # bp is small & static
                cp = pltpu.make_async_copy(
                    user_hbm.at[pl.ds(ids_ref[b], 1), :],
                    u_vmem.at[pl.ds(b, 1), :],
                    sems.at[b],
                )
                cp.start()
                copies.append(cp)
            for cp in copies:
                cp.wait()

        u = u_vmem[...].astype(jnp.bfloat16)          # MXU path stays bf16
        o_ref[...] = jnp.dot(u, itT_ref[...],
                             preferred_element_type=jnp.float32)

    return kernel


def _pallas_predict(user_id, user_emb, itT_bf16, item_num, *, tile_items=4096):
    """scores[b, i] = user_emb[user_id[b]] . item_emb[i], one Pallas call."""
    B = user_id.shape[0]
    _, D = user_emb.shape
    Np = itT_bf16.shape[1]                 # lane-padded at init (mult. of 128)

    Bp = max(8, _round_up(B, 8))           # sublane / MXU-M minimum
    ids = jnp.zeros((Bp,), jnp.int32).at[:B].set(user_id.astype(jnp.int32))

    tn = max(128, min(_round_up(tile_items, 128), Np))
    grid = ((Np + tn - 1) // tn,)          # ragged last tile handled by Pallas

    flops = 2 * Bp * D * Np
    bytes_accessed = D * Np * 2 + Bp * D * 4 + Bp * Np * 4

    scores = pl.pallas_call(
        _make_predict_kernel(Bp),
        out_shape=jax.ShapeDtypeStruct((Bp, Np), jnp.float32),
        grid_spec=pltpu.PrefetchScalarGridSpec(
            num_scalar_prefetch=1,                       # user ids -> SMEM
            grid=grid,
            in_specs=[
                pl.BlockSpec(memory_space=pl.ANY),       # user table in HBM
                pl.BlockSpec((D, tn), lambda j, ids_ref: (0, j)),
            ],
            out_specs=pl.BlockSpec((Bp, tn), lambda j, ids_ref: (0, j)),
            scratch_shapes=[
                pltpu.VMEM((Bp, D), jnp.float32),        # gathered user rows
                pltpu.SemaphoreType.DMA((Bp,)),
            ],
        ),
        compiler_params=pltpu.CompilerParams(
            # The gathered-rows scratch is filled only at step 0 and reused,
            # so the item-tile axis must stay sequential on one core.
            dimension_semantics=("arbitrary",),
        ),
        cost_estimate=pl.CostEstimate(
            flops=flops, transcendentals=0, bytes_accessed=bytes_accessed
        ),
    )(ids, user_emb, itT_bf16)
    return scores[:B, :item_num]


# ------------------------ fused L1 + L2 over both tables --------------------

def _make_l1_l2_kernel(Ru, Ri, tr_u, tr_i, u_tiles, i_tiles):
    last = u_tiles + i_tiles - 1
    u_tail = Ru - (u_tiles - 1) * tr_u     # valid rows in the last user tile
    i_tail = Ri - (i_tiles - 1) * tr_i     # valid rows in the last item tile

    def accum(ref, valid_rows, l1_acc, l2_acc):
        """Accumulate |x| and x^2 over ref[:valid_rows] (valid_rows static)."""
        d = ref.shape[1]
        nfull = valid_rows // _CHUNK
        rem = valid_rows - nfull * _CHUNK
        for c in range(nfull):                           # static, unrolled
            x = ref[pl.ds(c * _CHUNK, _CHUNK), :]
            a = jnp.abs(x)                               # abs computed once
            l1_acc[...] += a
            l2_acc[...] += x * x
        if rem > 0:                                      # ragged tail (static)
            x = ref[pl.ds(nfull * _CHUNK, _CHUNK), :]
            rid = lax.broadcasted_iota(jnp.int32, (_CHUNK, d), 0)
            x = jnp.where(rid < rem, x, 0.0)             # mask stale rows
            l1_acc[...] += jnp.abs(x)
            l2_acc[...] += x * x

    def kernel(u_ref, it_ref, o_ref, l1_acc, l2_acc):
        i = pl.program_id(0)

        @pl.when(i == 0)
        def _():
            l1_acc[...] = jnp.zeros_like(l1_acc)
            l2_acc[...] = jnp.zeros_like(l2_acc)

        # -------- user-table phase: grid steps [0, u_tiles) --------
        if u_tiles > 1:
            @pl.when(i < u_tiles - 1)
            def _():
                accum(u_ref, tr_u, l1_acc, l2_acc)

        @pl.when(i == u_tiles - 1)
        def _():
            accum(u_ref, u_tail, l1_acc, l2_acc)

        # -------- item-table phase: grid steps [u_tiles, last] --------
        if i_tiles > 1:
            @pl.when(jnp.logical_and(i >= u_tiles, i < last))
            def _():
                accum(it_ref, tr_i, l1_acc, l2_acc)

        @pl.when(i == last)
        def _():
            accum(it_ref, i_tail, l1_acc, l2_acc)
            # Single cross-lane / cross-sublane reduce at the very end.
            o_ref[0] = jnp.sum(l1_acc[...])
            o_ref[1] = jnp.sum(l2_acc[...])

    return kernel


def _fused_l1_l2(user_emb, item_emb, *, tile_rows=2048):
    """One gridded pass over BOTH tables returning (sum|x|, sum x^2)."""
    Ru, D = user_emb.shape
    Ri, Di = item_emb.shape
    assert D == Di

    def tile_for(rows):
        t = min(tile_rows, _round_up(rows, _CHUNK))
        return max(_CHUNK, (t // _CHUNK) * _CHUNK)

    tr_u, tr_i = tile_for(Ru), tile_for(Ri)
    u_tiles = (Ru + tr_u - 1) // tr_u
    i_tiles = (Ri + tr_i - 1) // tr_i
    n_steps = u_tiles + i_tiles

    kernel = _make_l1_l2_kernel(Ru, Ri, tr_u, tr_i, u_tiles, i_tiles)

    out = pl.pallas_call(
        kernel,
        out_shape=jax.ShapeDtypeStruct((2,), jnp.float32),
        grid_spec=pltpu.PrefetchScalarGridSpec(
            num_scalar_prefetch=0,
            grid=(n_steps,),
            in_specs=[
                # The inactive table's block index is pinned, so its tile
                # stays resident and is not re-streamed during the other
                # table's phase.
                pl.BlockSpec((tr_u, D),
                             lambda i: (jnp.minimum(i, u_tiles - 1), 0)),
                pl.BlockSpec((tr_i, D),
                             lambda i: (jnp.minimum(
                                 jnp.maximum(i - u_tiles, 0), i_tiles - 1), 0)),
            ],
            out_specs=pl.BlockSpec(memory_space=pltpu.SMEM),
            scratch_shapes=[
                pltpu.VMEM((_CHUNK, D), jnp.float32),     # L1 accumulator
                pltpu.VMEM((_CHUNK, D), jnp.float32),     # L2 accumulator
            ],
        ),
        compiler_params=pltpu.CompilerParams(
            # Reduction with grid-resident scratch accumulators -> sequential.
            # TODO(synk): on v7x this HBM-bound pass could also be split over
            # both TensorCores with a leading size-2 parallel axis + per-core
            # partial sums combined in the wrapper.
            dimension_semantics=("arbitrary",),
        ),
        cost_estimate=pl.CostEstimate(
            flops=3 * (Ru + Ri) * D,
            transcendentals=0,
            bytes_accessed=(Ru + Ri) * D * 4 + 8,
        ),
    )(user_emb, item_emb)
    return out[0], out[1]


# ------------------------------- model class --------------------------------

class BasicRecommender:
    """JAX/Pallas realization of the abstract PyTorch BasicRecommender."""

    def __init__(self, user_num: int, item_num: int, emb_dim: int = 128):
        self.user_num = user_num
        self.item_num = item_num
        self.emb_dim = emb_dim
        # Deterministic parameter init (the abstract module defines no params;
        # MF embeddings are the canonical concrete instantiation).
        k_u, k_i = jax.random.split(jax.random.PRNGKey(0))
        self.user_emb = (
            jax.random.normal(k_u, (user_num, emb_dim), jnp.float32) * 0.1
        )
        self.item_emb = (
            jax.random.normal(k_i, (item_num, emb_dim), jnp.float32) * 0.1
        )
        # Pre-transposed bf16 item table, lane-padded ONCE at construction
        # (this is the big HBM stream of the predict path).
        # TODO(synk): for small catalogs the whole bf16 table fits VMEM and
        # could be kept resident across predict calls.
        n_pad = _round_up(item_num, 128)
        itT = self.item_emb.T.astype(jnp.bfloat16)
        if n_pad != item_num:
            itT = jnp.pad(itT, ((0, 0), (0, n_pad - item_num)))
        self.item_emb_T_bf16 = itT
        # NOTE: the reg cache is not invalidated if embeddings are mutated.
        self._reg_cache = None

    def forward(self, *args):
        # TODO(synk): abstract in the PyTorch source (raises NotImplementedError);
        # nothing to lower to Pallas.
        raise NotImplementedError

    def _reg_sums(self):
        # One fused L1+L2 pass covering BOTH tables (single pallas_call).
        if self._reg_cache is None:
            l1, l2 = _fused_l1_l2(self.user_emb, self.item_emb)
            self._reg_cache = (l1, l2)
        return self._reg_cache

    def get_L2_reg(self):
        return self._reg_sums()[1]

    def get_L1_reg(self):
        return self._reg_sums()[0]

    def predict(self, user_id):
        # user_id: (B,) int -> scores (B, item_num). The user-row gather is
        # fused into the kernel (scalar-prefetched ids + manual DMA).
        user_id = jnp.asarray(user_id, jnp.int32)
        return _pallas_predict(user_id, self.user_emb, self.item_emb_T_bf16,
                               self.item_num)


# ---------------------------------- main -------------------------------------

if __name__ == "__main__":
    user_num, item_num, emb_dim = 64, 1024, 128
    model = BasicRecommender(user_num, item_num, emb_dim)

    user_id = jnp.array([1, 5], dtype=jnp.int32)  # batch=2
    scores = model.predict(user_id)
    l2 = model.get_L2_reg()
    l1 = model.get_L1_reg()

    jax.block_until_ready((scores, l2, l1))

    # Reference check against plain JAX (same bf16-rounded inputs for predict).
    u_ref = model.user_emb[user_id].astype(jnp.bfloat16).astype(jnp.float32)
    it_ref = model.item_emb_T_bf16[:, :item_num].astype(jnp.float32)
    ref_scores = u_ref @ it_ref
    ref_l2 = jnp.sum(model.user_emb ** 2) + jnp.sum(model.item_emb ** 2)
    ref_l1 = jnp.sum(jnp.abs(model.user_emb)) + jnp.sum(jnp.abs(model.item_emb))

    assert scores.shape == (2, item_num)
    assert jnp.allclose(scores, ref_scores, atol=2e-3, rtol=2e-3)
    assert jnp.allclose(l2, ref_l2, atol=1e-2, rtol=1e-3)
    assert jnp.allclose(l1, ref_l1, atol=1e-1, rtol=1e-3)

    print("KERNEL_OK")
</pallas_src>

<mosaic_0001>
module attributes {stable_mosaic.version = 11 : i64} {
  func.func @kernel(%arg0: i32, %arg1: memref<8xi32, #tpu.memory_space<smem>>, %arg2: memref<64x128xf32, #tpu.memory_space<any>>, %arg3: memref<128x1024xbf16, #tpu.memory_space<vmem>>, %arg4: memref<8x1024xf32, #tpu.memory_space<vmem>>, %arg5: memref<8x128xf32, #tpu.memory_space<vmem>>, %arg6: memref<8x!tpu.dma_semaphore, #tpu.memory_space<semaphore_mem>>) attributes {dimension_semantics = [#tpu.dimension_semantics<arbitrary>], iteration_bounds = array<i64: 1>, scalar_prefetch = 1 : i64, scratch_operands = 2 : i64, tpu.core_type = #tpu.core_type<tc>, window_params = [{}, {transform_indices = @transform_1, window_bounds = array<i64: 128, 1024>}, {transform_indices = @transform_2, window_bounds = array<i64: 8, 1024>}]} {
    %c0_i32 = arith.constant 0 : i32
    %0 = arith.cmpi eq, %arg0, %c0_i32 : i32
    %1 = arith.extui %0 : i1 to i32
    %c0_i32_0 = arith.constant 0 : i32
    %2 = arith.cmpi ne, %1, %c0_i32_0 : i32
    scf.if %2 {
      %c0_6 = arith.constant 0 : index
      %8 = memref.load %arg1[%c0_6] : memref<8xi32, #tpu.memory_space<smem>>
      %c0_i32_7 = arith.constant 0 : i32
      %c0_i32_8 = arith.constant 0 : i32
      %9 = tpu.memref_slice %arg2[%8, %c0_i32_8] : memref<64x128xf32, #tpu.memory_space<any>> -> memref<1x128xf32, #tpu.memory_space<any>>
      %c0_i32_9 = arith.constant 0 : i32
      %c0_i32_10 = arith.constant 0 : i32
      %10 = tpu.memref_slice %arg5[%c0_i32_9, %c0_i32_10] : memref<8x128xf32, #tpu.memory_space<vmem>> -> memref<1x128xf32, #tpu.memory_space<vmem>>
      %11 = tpu.memref_slice %arg6[%c0_i32_7] : memref<8x!tpu.dma_semaphore, #tpu.memory_space<semaphore_mem>> -> memref<1x!tpu.dma_semaphore, #tpu.memory_space<semaphore_mem>>
      %12 = tpu.memref_squeeze %11 : memref<1x!tpu.dma_semaphore, #tpu.memory_space<semaphore_mem>> -> memref<!tpu.dma_semaphore, #tpu.memory_space<semaphore_mem>>
      tpu.enqueue_dma source(%9 : memref<1x128xf32, #tpu.memory_space<any>>) target(%10 : memref<1x128xf32, #tpu.memory_space<vmem>>) target_semaphore(%12 : memref<!tpu.dma_semaphore, #tpu.memory_space<semaphore_mem>>)
      %c1 = arith.constant 1 : index
      %13 = memref.load %arg1[%c1] : memref<8xi32, #tpu.memory_space<smem>>
      %c1_i32 = arith.constant 1 : i32
      %c0_i32_11 = arith.constant 0 : i32
      %14 = tpu.memref_slice %arg2[%13, %c0_i32_11] : memref<64x128xf32, #tpu.memory_space<any>> -> memref<1x128xf32, #tpu.memory_space<any>>
      %c1_i32_12 = arith.constant 1 : i32
      %c0_i32_13 = arith.constant 0 : i32
      %15 = tpu.memref_slice %arg5[%c1_i32_12, %c0_i32_13] : memref<8x128xf32, #tpu.memory_space<vmem>> -> memref<1x128xf32, #tpu.memory_space<vmem>>
      %16 = tpu.memref_slice %arg6[%c1_i32] : memref<8x!tpu.dma_semaphore, #tpu.memory_space<semaphore_mem>> -> memref<1x!tpu.dma_semaphore, #tpu.memory_space<semaphore_mem>>
      %17 = tpu.memref_squeeze %16 : memref<1x!tpu.dma_semaphore, #tpu.memory_space<semaphore_mem>> -> memref<!tpu.dma_semaphore, #tpu.memory_space<semaphore_mem>>
      tpu.enqueue_dma source(%14 : memref<1x128xf32, #tpu.memory_space<any>>) target(%15 : memref<1x128xf32, #tpu.memory_space<vmem>>) target_semaphore(%17 : memref<!tpu.dma_semaphore, #tpu.memory_space<semaphore_mem>>)
      %c2 = arith.constant 2 : index
      %18 = memref.load %arg1[%c2] : memref<8xi32, #tpu.memory_space<smem>>
      %c2_i32 = arith.constant 2 : i32
      %c0_i32_14 = arith.constant 0 : i32
      %19 = tpu.memref_slice %arg2[%18, %c0_i32_14] : memref<64x128xf32, #tpu.memory_space<any>> -> memref<1x128xf32, #tpu.memory_space<any>>
      %c2_i32_15 = arith.constant 2 : i32
      %c0_i32_16 = arith.constant 0 : i32
      %20 = tpu.memref_slice %arg5[%c2_i32_15, %c0_i32_16] : memref<8x128xf32, #tpu.memory_space<vmem>> -> memref<1x128xf32, #tpu.memory_space<vmem>>
      %21 = tpu.memref_slice %arg6[%c2_i32] : memref<8x!tpu.dma_semaphore, #tpu.memory_space<semaphore_mem>> -> memref<1x!tpu.dma_semaphore, #tpu.memory_space<semaphore_mem>>
      %22 = tpu.memref_squeeze %21 : memref<1x!tpu.dma_semaphore, #tpu.memory_space<semaphore_mem>> -> memref<!tpu.dma_semaphore, #tpu.memory_space<semaphore_mem>>
      tpu.enqueue_dma source(%19 : memref<1x128xf32, #tpu.memory_space<any>>) target(%20 : memref<1x128xf32, #tpu.memory_space<vmem>>) target_semaphore(%22 : memref<!tpu.dma_semaphore, #tpu.memory_space<semaphore_mem>>)
      %c3 = arith.constant 3 : index
      %23 = memref.load %arg1[%c3] : memref<8xi32, #tpu.memory_space<smem>>
      %c3_i32 = arith.constant 3 : i32
      %c0_i32_17 = arith.constant 0 : i32
      %24 = tpu.memref_slice %arg2[%23, %c0_i32_17] : memref<64x128xf32, #tpu.memory_space<any>> -> memref<1x128xf32, #tpu.memory_space<any>>
      %c3_i32_18 = arith.constant 3 : i32
      %c0_i32_19 = arith.constant 0 : i32
      %25 = tpu.memref_slice %arg5[%c3_i32_18, %c0_i32_19] : memref<8x128xf32, #tpu.memory_space<vmem>> -> memref<1x128xf32, #tpu.memory_space<vmem>>
      %26 = tpu.memref_slice %arg6[%c3_i32] : memref<8x!tpu.dma_semaphore, #tpu.memory_space<semaphore_mem>> -> memref<1x!tpu.dma_semaphore, #tpu.memory_space<semaphore_mem>>
      %27 = tpu.memref_squeeze %26 : memref<1x!tpu.dma_semaphore, #tpu.memory_space<semaphore_mem>> -> memref<!tpu.dma_semaphore, #tpu.memory_space<semaphore_mem>>
      tpu.enqueue_dma source(%24 : memref<1x128xf32, #tpu.memory_space<any>>) target(%25 : memref<1x128xf32, #tpu.memory_space<vmem>>) target_semaphore(%27 : memref<!tpu.dma_semaphore, #tpu.memory_space<semaphore_mem>>)
      %c4 = arith.constant 4 : index
      %28 = memref.load %arg1[%c4] : memref<8xi32, #tpu.memory_space<smem>>
      %c4_i32 = arith.constant 4 : i32
      %c0_i32_20 = arith.constant 0 : i32
      %29 = tpu.memref_slice %arg2[%28, %c0_i32_20] : memref<64x128xf32, #tpu.memory_space<any>> -> memref<1x128xf32, #tpu.memory_space<any>>
      %c4_i32_21 = arith.constant 4 : i32
      %c0_i32_22 = arith.constant 0 : i32
      %30 = tpu.memref_slice %arg5[%c4_i32_21, %c0_i32_22] : memref<8x128xf32, #tpu.memory_space<vmem>> -> memref<1x128xf32, #tpu.memory_space<vmem>>
      %31 = tpu.memref_slice %arg6[%c4_i32] : memref<8x!tpu.dma_semaphore, #tpu.memory_space<semaphore_mem>> -> memref<1x!tpu.dma_semaphore, #tpu.memory_space<semaphore_mem>>
      %32 = tpu.memref_squeeze %31 : memref<1x!tpu.dma_semaphore, #tpu.memory_space<semaphore_mem>> -> memref<!tpu.dma_semaphore, #tpu.memory_space<semaphore_mem>>
      tpu.enqueue_dma source(%29 : memref<1x128xf32, #tpu.memory_space<any>>) target(%30 : memref<1x128xf32, #tpu.memory_space<vmem>>) target_semaphore(%32 : memref<!tpu.dma_semaphore, #tpu.memory_space<semaphore_mem>>)
      %c5 = arith.constant 5 : index
      %33 = memref.load %arg1[%c5] : memref<8xi32, #tpu.memory_space<smem>>
      %c5_i32 = arith.constant 5 : i32
      %c0_i32_23 = arith.constant 0 : i32
      %34 = tpu.memref_slice %arg2[%33, %c0_i32_23] : memref<64x128xf32, #tpu.memory_space<any>> -> memref<1x128xf32, #tpu.memory_space<any>>
      %c5_i32_24 = arith.constant 5 : i32
      %c0_i32_25 = arith.constant 0 : i32
      %35 = tpu.memref_slice %arg5[%c5_i32_24, %c0_i32_25] : memref<8x128xf32, #tpu.memory_space<vmem>> -> memref<1x128xf32, #tpu.memory_space<vmem>>
      %36 = tpu.memref_slice %arg6[%c5_i32] : memref<8x!tpu.dma_semaphore, #tpu.memory_space<semaphore_mem>> -> memref<1x!tpu.dma_semaphore, #tpu.memory_space<semaphore_mem>>
      %37 = tpu.memref_squeeze %36 : memref<1x!tpu.dma_semaphore, #tpu.memory_space<semaphore_mem>> -> memref<!tpu.dma_semaphore, #tpu.memory_space<semaphore_mem>>
      tpu.enqueue_dma source(%34 : memref<1x128xf32, #tpu.memory_space<any>>) target(%35 : memref<1x128xf32, #tpu.memory_space<vmem>>) target_semaphore(%37 : memref<!tpu.dma_semaphore, #tpu.memory_space<semaphore_mem>>)
      %c6 = arith.constant 6 : index
      %38 = memref.load %arg1[%c6] : memref<8xi32, #tpu.memory_space<smem>>
      %c6_i32 = arith.constant 6 : i32
      %c0_i32_26 = arith.constant 0 : i32
      %39 = tpu.memref_slice %arg2[%38, %c0_i32_26] : memref<64x128xf32, #tpu.memory_space<any>> -> memref<1x128xf32, #tpu.memory_space<any>>
      %c6_i32_27 = arith.constant 6 : i32
      %c0_i32_28 = arith.constant 0 : i32
      %40 = tpu.memref_slice %arg5[%c6_i32_27, %c0_i32_28] : memref<8x128xf32, #tpu.memory_space<vmem>> -> memref<1x128xf32, #tpu.memory_space<vmem>>
      %41 = tpu.memref_slice %arg6[%c6_i32] : memref<8x!tpu.dma_semaphore, #tpu.memory_space<semaphore_mem>> -> memref<1x!tpu.dma_semaphore, #tpu.memory_space<semaphore_mem>>
      %42 = tpu.memref_squeeze %41 : memref<1x!tpu.dma_semaphore, #tpu.memory_space<semaphore_mem>> -> memref<!tpu.dma_semaphore, #tpu.memory_space<semaphore_mem>>
      tpu.enqueue_dma source(%39 : memref<1x128xf32, #tpu.memory_space<any>>) target(%40 : memref<1x128xf32, #tpu.memory_space<vmem>>) target_semaphore(%42 : memref<!tpu.dma_semaphore, #tpu.memory_space<semaphore_mem>>)
      %c7 = arith.constant 7 : index
      %43 = memref.load %arg1[%c7] : memref<8xi32, #tpu.memory_space<smem>>
      %c7_i32 = arith.constant 7 : i32
      %c0_i32_29 = arith.constant 0 : i32
      %44 = tpu.memref_slice %arg2[%43, %c0_i32_29] : memref<64x128xf32, #tpu.memory_space<any>> -> memref<1x128xf32, #tpu.memory_space<any>>
      %c7_i32_30 = arith.constant 7 : i32
      %c0_i32_31 = arith.constant 0 : i32
      %45 = tpu.memref_slice %arg5[%c7_i32_30, %c0_i32_31] : memref<8x128xf32, #tpu.memory_space<vmem>> -> memref<1x128xf32, #tpu.memory_space<vmem>>
      %46 = tpu.memref_slice %arg6[%c7_i32] : memref<8x!tpu.dma_semaphore, #tpu.memory_space<semaphore_mem>> -> memref<1x!tpu.dma_semaphore, #tpu.memory_space<semaphore_mem>>
      %47 = tpu.memref_squeeze %46 : memref<1x!tpu.dma_semaphore, #tpu.memory_space<semaphore_mem>> -> memref<!tpu.dma_semaphore, #tpu.memory_space<semaphore_mem>>
      tpu.enqueue_dma source(%44 : memref<1x128xf32, #tpu.memory_space<any>>) target(%45 : memref<1x128xf32, #tpu.memory_space<vmem>>) target_semaphore(%47 : memref<!tpu.dma_semaphore, #tpu.memory_space<semaphore_mem>>)
      %c0_i32_32 = arith.constant 0 : i32
      %c0_i32_33 = arith.constant 0 : i32
      %48 = tpu.memref_slice %arg2[%8, %c0_i32_33] : memref<64x128xf32, #tpu.memory_space<any>> -> memref<1x128xf32, #tpu.memory_space<any>>
      %c0_i32_34 = arith.constant 0 : i32
      %c0_i32_35 = arith.constant 0 : i32
      %49 = tpu.memref_slice %arg5[%c0_i32_34, %c0_i32_35] : memref<8x128xf32, #tpu.memory_space<vmem>> -> memref<1x128xf32, #tpu.memory_space<vmem>>
      %50 = tpu.memref_slice %arg6[%c0_i32_32] : memref<8x!tpu.dma_semaphore, #tpu.memory_space<semaphore_mem>> -> memref<1x!tpu.dma_semaphore, #tpu.memory_space<semaphore_mem>>
      %51 = tpu.memref_squeeze %50 : memref<1x!tpu.dma_semaphore, #tpu.memory_space<semaphore_mem>> -> memref<!tpu.dma_semaphore, #tpu.memory_space<semaphore_mem>>
      tpu.wait_dma2 semaphore(%51 : memref<!tpu.dma_semaphore, #tpu.memory_space<semaphore_mem>>) src(%48 : memref<1x128xf32, #tpu.memory_space<any>>) dst(%49 : memref<1x128xf32, #tpu.memory_space<vmem>>)
      %c1_i32_36 = arith.constant 1 : i32
      %c0_i32_37 = arith.constant 0 : i32
      %52 = tpu.memref_slice %arg2[%13, %c0_i32_37] : memref<64x128xf32, #tpu.memory_space<any>> -> memref<1x128xf32, #tpu.memory_space<any>>
      %c1_i32_38 = arith.constant 1 : i32
      %c0_i32_39 = arith.constant 0 : i32
      %53 = tpu.memref_slice %arg5[%c1_i32_38, %c0_i32_39] : memref<8x128xf32, #tpu.memory_space<vmem>> -> memref<1x128xf32, #tpu.memory_space<vmem>>
      %54 = tpu.memref_slice %arg6[%c1_i32_36] : memref<8x!tpu.dma_semaphore, #tpu.memory_space<semaphore_mem>> -> memref<1x!tpu.dma_semaphore, #tpu.memory_space<semaphore_mem>>
      %55 = tpu.memref_squeeze %54 : memref<1x!tpu.dma_semaphore, #tpu.memory_space<semaphore_mem>> -> memref<!tpu.dma_semaphore, #tpu.memory_space<semaphore_mem>>
      tpu.wait_dma2 semaphore(%55 : memref<!tpu.dma_semaphore, #tpu.memory_space<semaphore_mem>>) src(%52 : memref<1x128xf32, #tpu.memory_space<any>>) dst(%53 : memref<1x128xf32, #tpu.memory_space<vmem>>)
      %c2_i32_40 = arith.constant 2 : i32
      %c0_i32_41 = arith.constant 0 : i32
      %56 = tpu.memref_slice %arg2[%18, %c0_i32_41] : memref<64x128xf32, #tpu.memory_space<any>> -> memref<1x128xf32, #tpu.memory_space<any>>
      %c2_i32_42 = arith.constant 2 : i32
      %c0_i32_43 = arith.constant 0 : i32
      %57 = tpu.memref_slice %arg5[%c2_i32_42, %c0_i32_43] : memref<8x128xf32, #tpu.memory_space<vmem>> -> memref<1x128xf32, #tpu.memory_space<vmem>>
      %58 = tpu.memref_slice %arg6[%c2_i32_40] : memref<8x!tpu.dma_semaphore, #tpu.memory_space<semaphore_mem>> -> memref<1x!tpu.dma_semaphore, #tpu.memory_space<semaphore_mem>>
      %59 = tpu.memref_squeeze %58 : memref<1x!tpu.dma_semaphore, #tpu.memory_space<semaphore_mem>> -> memref<!tpu.dma_semaphore, #tpu.memory_space<semaphore_mem>>
      tpu.wait_dma2 semaphore(%59 : memref<!tpu.dma_semaphore, #tpu.memory_space<semaphore_mem>>) src(%56 : memref<1x128xf32, #tpu.memory_space<any>>) dst(%57 : memref<1x128xf32, #tpu.memory_space<vmem>>)
      %c3_i32_44 = arith.constant 3 : i32
      %c0_i32_45 = arith.constant 0 : i32
      %60 = tpu.memref_slice %arg2[%23, %c0_i32_45] : memref<64x128xf32, #tpu.memory_space<any>> -> memref<1x128xf32, #tpu.memory_space<any>>
      %c3_i32_46 = arith.constant 3 : i32
      %c0_i32_47 = arith.constant 0 : i32
      %61 = tpu.memref_slice %arg5[%c3_i32_46, %c0_i32_47] : memref<8x128xf32, #tpu.memory_space<vmem>> -> memref<1x128xf32, #tpu.memory_space<vmem>>
      %62 = tpu.memref_slice %arg6[%c3_i32_44] : memref<8x!tpu.dma_semaphore, #tpu.memory_space<semaphore_mem>> -> memref<1x!tpu.dma_semaphore, #tpu.memory_space<semaphore_mem>>
      %63 = tpu.memref_squeeze %62 : memref<1x!tpu.dma_semaphore, #tpu.memory_space<semaphore_mem>> -> memref<!tpu.dma_semaphore, #tpu.memory_space<semaphore_mem>>
      tpu.wait_dma2 semaphore(%63 : memref<!tpu.dma_semaphore, #tpu.memory_space<semaphore_mem>>) src(%60 : memref<1x128xf32, #tpu.memory_space<any>>) dst(%61 : memref<1x128xf32, #tpu.memory_space<vmem>>)
      %c4_i32_48 = arith.constant 4 : i32
      %c0_i32_49 = arith.constant 0 : i32
      %64 = tpu.memref_slice %arg2[%28, %c0_i32_49] : memref<64x128xf32, #tpu.memory_space<any>> -> memref<1x128xf32, #tpu.memory_space<any>>
      %c4_i32_50 = arith.constant 4 : i32
      %c0_i32_51 = arith.constant 0 : i32
      %65 = tpu.memref_slice %arg5[%c4_i32_50, %c0_i32_51] : memref<8x128xf32, #tpu.memory_space<vmem>> -> memref<1x128xf32, #tpu.memory_space<vmem>>
      %66 = tpu.memref_slice %arg6[%c4_i32_48] : memref<8x!tpu.dma_semaphore, #tpu.memory_space<semaphore_mem>> -> memref<1x!tpu.dma_semaphore, #tpu.memory_space<semaphore_mem>>
      %67 = tpu.memref_squeeze %66 : memref<1x!tpu.dma_semaphore, #tpu.memory_space<semaphore_mem>> -> memref<!tpu.dma_semaphore, #tpu.memory_space<semaphore_mem>>
      tpu.wait_dma2 semaphore(%67 : memref<!tpu.dma_semaphore, #tpu.memory_space<semaphore_mem>>) src(%64 : memref<1x128xf32, #tpu.memory_space<any>>) dst(%65 : memref<1x128xf32, #tpu.memory_space<vmem>>)
      %c5_i32_52 = arith.constant 5 : i32
      %c0_i32_53 = arith.constant 0 : i32
      %68 = tpu.memref_slice %arg2[%33, %c0_i32_53] : memref<64x128xf32, #tpu.memory_space<any>> -> memref<1x128xf32, #tpu.memory_space<any>>
      %c5_i32_54 = arith.constant 5 : i32
      %c0_i32_55 = arith.constant 0 : i32
      %69 = tpu.memref_slice %arg5[%c5_i32_54, %c0_i32_55] : memref<8x128xf32, #tpu.memory_space<vmem>> -> memref<1x128xf32, #tpu.memory_space<vmem>>
      %70 = tpu.memref_slice %arg6[%c5_i32_52] : memref<8x!tpu.dma_semaphore, #tpu.memory_space<semaphore_mem>> -> memref<1x!tpu.dma_semaphore, #tpu.memory_space<semaphore_mem>>
      %71 = tpu.memref_squeeze %70 : memref<1x!tpu.dma_semaphore, #tpu.memory_space<semaphore_mem>> -> memref<!tpu.dma_semaphore, #tpu.memory_space<semaphore_mem>>
      tpu.wait_dma2 semaphore(%71 : memref<!tpu.dma_semaphore, #tpu.memory_space<semaphore_mem>>) src(%68 : memref<1x128xf32, #tpu.memory_space<any>>) dst(%69 : memref<1x128xf32, #tpu.memory_space<vmem>>)
      %c6_i32_56 = arith.constant 6 : i32
      %c0_i32_57 = arith.constant 0 : i32
      %72 = tpu.memref_slice %arg2[%38, %c0_i32_57] : memref<64x128xf32, #tpu.memory_space<any>> -> memref<1x128xf32, #tpu.memory_space<any>>
      %c6_i32_58 = arith.constant 6 : i32
      %c0_i32_59 = arith.constant 0 : i32
      %73 = tpu.memref_slice %arg5[%c6_i32_58, %c0_i32_59] : memref<8x128xf32, #tpu.memory_space<vmem>> -> memref<1x128xf32, #tpu.memory_space<vmem>>
      %74 = tpu.memref_slice %arg6[%c6_i32_56] : memref<8x!tpu.dma_semaphore, #tpu.memory_space<semaphore_mem>> -> memref<1x!tpu.dma_semaphore, #tpu.memory_space<semaphore_mem>>
      %75 = tpu.memref_squeeze %74 : memref<1x!tpu.dma_semaphore, #tpu.memory_space<semaphore_mem>> -> memref<!tpu.dma_semaphore, #tpu.memory_space<semaphore_mem>>
      tpu.wait_dma2 semaphore(%75 : memref<!tpu.dma_semaphore, #tpu.memory_space<semaphore_mem>>) src(%72 : memref<1x128xf32, #tpu.memory_space<any>>) dst(%73 : memref<1x128xf32, #tpu.memory_space<vmem>>)
      %c7_i32_60 = arith.constant 7 : i32
      %c0_i32_61 = arith.constant 0 : i32
      %76 = tpu.memref_slice %arg2[%43, %c0_i32_61] : memref<64x128xf32, #tpu.memory_space<any>> -> memref<1x128xf32, #tpu.memory_space<any>>
      %c7_i32_62 = arith.constant 7 : i32
      %c0_i32_63 = arith.constant 0 : i32
      %77 = tpu.memref_slice %arg5[%c7_i32_62, %c0_i32_63] : memref<8x128xf32, #tpu.memory_space<vmem>> -> memref<1x128xf32, #tpu.memory_space<vmem>>
      %78 = tpu.memref_slice %arg6[%c7_i32_60] : memref<8x!tpu.dma_semaphore, #tpu.memory_space<semaphore_mem>> -> memref<1x!tpu.dma_semaphore, #tpu.memory_space<semaphore_mem>>
      %79 = tpu.memref_squeeze %78 : memref<1x!tpu.dma_semaphore, #tpu.memory_space<semaphore_mem>> -> memref<!tpu.dma_semaphore, #tpu.memory_space<semaphore_mem>>
      tpu.wait_dma2 semaphore(%79 : memref<!tpu.dma_semaphore, #tpu.memory_space<semaphore_mem>>) src(%76 : memref<1x128xf32, #tpu.memory_space<any>>) dst(%77 : memref<1x128xf32, #tpu.memory_space<vmem>>)
    } else {
    }
    %c0 = arith.constant 0 : index
    %c0_1 = arith.constant 0 : index
    %3 = vector.load %arg5[%c0, %c0_1] : memref<8x128xf32, #tpu.memory_space<vmem>>, vector<8x128xf32>
    %4 = arith.truncf %3 : vector<8x128xf32> to vector<8x128xbf16>
    %c0_2 = arith.constant 0 : index
    %c0_3 = arith.constant 0 : index
    %5 = vector.load %arg3[%c0_2, %c0_3] : memref<128x1024xbf16, #tpu.memory_space<vmem>>, vector<128x1024xbf16>
    %cst = arith.constant dense<0.000000e+00> : vector<8x1024xf32>
    %6 = tpu.matmul %4, %5, %cst {dimension_numbers = #tpu.dot_dimension_numbers<[1], [0], [0], [1], [0, 0, 1, 1], [], []>} : vector<8x128xbf16>, vector<128x1024xbf16>, vector<8x1024xf32> -> vector<8x1024xf32>
    %c0_4 = arith.constant 0 : index
    %c0_5 = arith.constant 0 : index
    %7 = vector.load %arg4[%c0_4, %c0_5] : memref<8x1024xf32, #tpu.memory_space<vmem>>, vector<8x1024xf32>
    tpu.vector_store %arg4[%c0_4, %c0_5], %6 {strides = array<i32>} : memref<8x1024xf32, #tpu.memory_space<vmem>>, vector<8x1024xf32>,
    return
  }
  func.func @transform_1(%arg0: i32, %arg1: memref<8xi32, #tpu.memory_space<smem>>) -> (i32, i32) {
    %c0_i32 = arith.constant 0 : i32
    %c0_i32_0 = arith.constant 0 : i32
    return %c0_i32, %arg0 : i32, i32
  }
  func.func @transform_2(%arg0: i32, %arg1: memref<8xi32, #tpu.memory_space<smem>>) -> (i32, i32) {
    %c0_i32 = arith.constant 0 : i32
    %c0_i32_0 = arith.constant 0 : i32
    return %c0_i32, %arg0 : i32, i32
  }
}

</mosaic_0001>

<llo_original>
// kernel: tpu_custom_call.1
$region0: #{tpu_custom_call.1}
  #allocation0 [shape = 'u32[]', space=smem, size = 0x4, offset = 0x4, fixed_abs, tag = 'smem constant byte address 0x4 - core index']
  #allocation1 [shape = 'u32[72,128]{1,0:T(1,128)}', space=vmem, size = 0x9000, scoped, tag = 'internal scratch']
  #allocation2 [shape = 'f32[8,128]{1,0:T(8,128)}', space=vmem, size = 0x1000, scoped, tag = 'scratch operand']
  #allocation3 [shape = 's32[8]{0}', space=sflag, size = 0x20, scoped, tag = 'scratch operand']
  #allocation4 [shape = 's32[1]{0}', space=sflag, size = 0x4, scoped, tag = 'scoped memory for tpu_custom_call.1']
  #allocation5 [shape = 'u8[512]{0}', space=smem, size = 0x200, scoped, tag = 'prefetched SMEM operand 0']
  #allocation10 [shape = 's32[]', space=sflag, size = 0x4, offset = 0, fixed_abs, tag = 'sflag constant byte address 0x0 - dummy sync flag']
  #allocation11 [shape = 's32[]', space=sflag, size = 0x4, offset = 0, fixed_abs, tag = 'sflag constant byte address 0x0 - dummy sync flag']
  #allocation12 [shape = 'u32[]', space=smem, size = 0x4, offset = 0x44, fixed_abs, tag = 'smem constant byte address 0x44 - assertion arg 0']
  #allocation13 [shape = 'u32[]', space=smem, size = 0x4, offset = 0x48, fixed_abs, tag = 'smem constant byte address 0x48 - assertion arg 1']
  #allocation14 [shape = 's32[]', space=sflag, size = 0x4, offset = 0, fixed_abs, tag = 'sflag constant byte address 0x0 - dummy sync flag']
  #allocation15 [shape = 's32[]', space=sflag, size = 0x4, offset = 0, fixed_abs, tag = 'sflag constant byte address 0x0 - dummy sync flag']
  #allocation16 [shape = 's32[]', space=sflag, size = 0x4, offset = 0, fixed_abs, tag = 'sflag constant byte address 0x0 - dummy sync flag']
  #allocation17 [shape = 's32[]', space=sflag, size = 0x4, offset = 0, fixed_abs, tag = 'sflag constant byte address 0x0 - dummy sync flag']
  #allocation18 [shape = 's32[]', space=sflag, size = 0x4, offset = 0, fixed_abs, tag = 'sflag constant byte address 0x0 - dummy sync flag']
  #allocation19 [shape = 's32[]', space=sflag, size = 0x4, offset = 0, fixed_abs, tag = 'sflag constant byte address 0x0 - dummy sync flag']
  #allocation20 [shape = 's32[]', space=sflag, size = 0x4, offset = 0, fixed_abs, tag = 'sflag constant byte address 0x0 - dummy sync flag']
  #allocation21 [shape = 's32[]', space=sflag, size = 0x4, offset = 0, fixed_abs, tag = 'sflag constant byte address 0x0 - dummy sync flag']
  #allocation22 [shape = 's32[]', space=sflag, size = 0x4, offset = 0, fixed_abs, tag = 'sflag constant byte address 0x0 - dummy sync flag']
  #allocation23 [shape = 's32[]', space=sflag, size = 0x4, offset = 0, fixed_abs, tag = 'sflag constant byte address 0x0 - dummy sync flag']
  #allocation24 [shape = 's32[]', space=sflag, size = 0x4, offset = 0, fixed_abs, tag = 'sflag constant byte address 0x0 - dummy sync flag']
  #allocation25 [shape = 's32[]', space=sflag, size = 0x4, offset = 0, fixed_abs, tag = 'sflag constant byte address 0x0 - dummy sync flag']
  #allocation26 [shape = 's32[]', space=sflag, size = 0x4, offset = 0, fixed_abs, tag = 'sflag constant byte address 0x0 - dummy sync flag']
  #allocation27 [shape = 's32[]', space=sflag, size = 0x4, offset = 0, fixed_abs, tag = 'sflag constant byte address 0x0 - dummy sync flag']
  %s0 = inlined_call_operand.hbm [shape: s32[8], index: 0, kind: input, shape index: {}]
  %s1 = inlined_call_operand.hbm [shape: f32[64,128], index: 1, kind: input, shape index: {}]
  %s2 = inlined_call_operand.hbm [shape: bf16[128,1024], index: 2, kind: input, shape index: {}]
  %s3 = inlined_call_operand.hbm [shape: f32[8,1024], index: 3, kind: output, shape index: {}]
  %s4 = sld [smem:[#allocation0]]
  $region54: #{tpu_custom_call.1} parent=0
    _
  %s6 = ssub.s32 1, %s4
  %s7 = scalar_select 0, %s6, %s4
  %s9 = sshll.u32 %s0, 4
  %s10 = int_to_ptr.hbm [resolvable:$true] %s9
  %12 = dma.hbm_to_smem %s10, 16, [#allocation5], [#allocation4]
  %14 = dma.done [#allocation4], 16
  %15 = sfence
  $region1: #{tpu_custom_call.1} parent=0
    #allocation6 [shape = 'u8[262144]{0}', space=vmem, size = 0x40000, scoped, tag = 'input window, operand 2, single buffered']
    #allocation7 [shape = 's32[1]{0}', space=sflag, size = 0x4, scoped, tag = 'scoped memory for tpu_custom_call.1']
    #allocation8 [shape = 's32[1]{0}', space=sflag, size = 0x4, scoped, tag = 'scoped memory for tpu_custom_call.1']
    #allocation9 [shape = 'u8[32768]{0}', space=vmem, size = 0x8000, scoped, tag = 'output window, operand 0, single buffered']
    %16 = vsyncpa [#allocation7], 0
    %17 = vsyncpa [#allocation8], 0
    // Predicated region
    $region2: #{tpu_custom_call.1} parent=1 // pred_check
      _
    $region3: #{tpu_custom_call.1} parent=1 // pred_check_branch
      %19 = sbr.rel (0) target = $region5
    $region4: #{tpu_custom_call.1} parent=1 // pred_region
      %21 = vsyncadd [#allocation7], 0
      %s22 = sshll.u32 %s2, 4
      %s23 = int_to_ptr.hbm [resolvable:$true] %s22
      %s24 = sshll.u32 [#allocation6], 4
      %s25 = int_to_ptr.vmem [resolvable:$true] %s24
      %30 = dma.hbm_to_vmem [thread:$0]  %s23, 8192, %s25, [#allocation7], 512, 512, 32
    $region5: #{tpu_custom_call.1} parent=1 // pred_fallthru
      _
    // Predicated region
    $region6: #{tpu_custom_call.1} parent=1 // pred_check
      _
    $region7: #{tpu_custom_call.1} parent=1 // pred_check_branch
      %32 = sbr.rel (0) target = $region9
    $region8: #{tpu_custom_call.1} parent=1 // pred_region
      %34 = dma.done [#allocation7], 8192
    $region9: #{tpu_custom_call.1} parent=1 // pred_fallthru
      _
    %p35 = scmp.eq.s32.totalorder 0, 0
    // Predicated region
    $region10: #{tpu_custom_call.1} parent=1 // pred_check
      %p36 = pneg %p35
    $region11: #{tpu_custom_call.1} parent=1 // pred_check_branch
      %38 = sbr.rel (%p36) target = $region13
    $region12: #{tpu_custom_call.1} parent=1 // pred_region
      %s39 = sld [smem:[#allocation5]]
      %s40 = scalar_lea.hbm %s1, %s39
      // Predicated region
      $region14: #{tpu_custom_call.1} parent=12 // pred_check
        _
      $region15: #{tpu_custom_call.1} parent=12 // pred_check_branch
        %42 = sbr.rel target = $region17
      $region16: #{tpu_custom_call.1} parent=12 // pred_region
        %43 = sst [smem:[#allocation12]] [#allocation11]
        %44 = sst [smem:[#allocation13]] [#allocation10]
      $region17: #{tpu_custom_call.1} parent=12 // pred_fallthru
        _
      %46 = shalt.err (0)
      %s48 = sshll.u32 %s40, 4
      %s49 = int_to_ptr.hbm [resolvable:$true] %s48
      %s50 = sshll.u32 [#allocation2], 4
      %s51 = int_to_ptr.vmem [resolvable:$true] %s50
      %53 = dma.hbm_to_vmem [thread:$0]  %s49, 16, %s51, [#allocation3]
      %s54 = sld [smem:[#allocation5 + $0x1]]
      %s55 = scalar_lea.hbm %s1, %s54
      %s56 = scalar_lea.vmem [#allocation2], 1
      %s57 = scalar_lea.sflag [#allocation3], 1
      // Predicated region
      $region18: #{tpu_custom_call.1} parent=12 // pred_check
        _
      $region19: #{tpu_custom_call.1} parent=12 // pred_check_branch
        %59 = sbr.rel target = $region21
      $region20: #{tpu_custom_call.1} parent=12 // pred_region
        %60 = sst [smem:[#allocation12]] [#allocation15]
        %61 = sst [smem:[#allocation13]] [#allocation14]
      $region21: #{tpu_custom_call.1} parent=12 // pred_fallthru
        _
      %63 = shalt.err (0)
      %s65 = sshll.u32 %s55, 4
      %s66 = int_to_ptr.hbm [resolvable:$true] %s65
      %s67 = sshll.u32 %s56, 4
      %s68 = int_to_ptr.vmem [resolvable:$true] %s67
      %70 = dma.hbm_to_vmem [thread:$0]  %s66, 16, %s68, %s57
      %s71 = sld [smem:[#allocation5 + $0x2]]
      %s72 = scalar_lea.hbm %s1, %s71
      %s73 = scalar_lea.vmem [#allocation2], 2
      %s74 = scalar_lea.sflag [#allocation3], 2
      // Predicated region
      $region22: #{tpu_custom_call.1} parent=12 // pred_check
        _
      $region23: #{tpu_custom_call.1} parent=12 // pred_check_branch
        %76 = sbr.rel target = $region25
      $region24: #{tpu_custom_call.1} parent=12 // pred_region
        %77 = sst [smem:[#allocation12]] [#allocation17]
        %78 = sst [smem:[#allocation13]] [#allocation16]
      $region25: #{tpu_custom_call.1} parent=12 // pred_fallthru
        _
      %80 = shalt.err (0)
      %s82 = sshll.u32 %s72, 4
      %s83 = int_to_ptr.hbm [resolvable:$true] %s82
      %s84 = sshll.u32 %s73, 4
      %s85 = int_to_ptr.vmem [resolvable:$true] %s84
      %87 = dma.hbm_to_vmem [thread:$0]  %s83, 16, %s85, %s74
      %s88 = sld [smem:[#allocation5 + $0x3]]
      %s89 = scalar_lea.hbm %s1, %s88
      %s90 = scalar_lea.vmem [#allocation2], 3
      %s91 = scalar_lea.sflag [#allocation3], 3
      // Predicated region
      $region26: #{tpu_custom_call.1} parent=12 // pred_check
        _
      $region27: #{tpu_custom_call.1} parent=12 // pred_check_branch
        %93 = sbr.rel target = $region29
      $region28: #{tpu_custom_call.1} parent=12 // pred_region
        %94 = sst [smem:[#allocation12]] [#allocation19]
        %95 = sst [smem:[#allocation13]] [#allocation18]
      $region29: #{tpu_custom_call.1} parent=12 // pred_fallthru
        _
      %97 = shalt.err (0)
      %s99 = sshll.u32 %s89, 4
      %s100 = int_to_ptr.hbm [resolvable:$true] %s99
      %s101 = sshll.u32 %s90, 4
      %s102 = int_to_ptr.vmem [resolvable:$true] %s101
      %104 = dma.hbm_to_vmem [thread:$0]  %s100, 16, %s102, %s91
      %s105 = sld [smem:[#allocation5 + $0x4]]
      %s106 = scalar_lea.hbm %s1, %s105
      %s107 = scalar_lea.vmem [#allocation2], 4
      %s108 = scalar_lea.sflag [#allocation3], 4
      // Predicated region
      $region30: #{tpu_custom_call.1} parent=12 // pred_check
        _
      $region31: #{tpu_custom_call.1} parent=12 // pred_check_branch
        %110 = sbr.rel target = $region33
      $region32: #{tpu_custom_call.1} parent=12 // pred_region
        %111 = sst [smem:[#allocation12]] [#allocation21]
        %112 = sst [smem:[#allocation13]] [#allocation20]
      $region33: #{tpu_custom_call.1} parent=12 // pred_fallthru
        _
      %114 = shalt.err (0)
      %s116 = sshll.u32 %s106, 4
      %s117 = int_to_ptr.hbm [resolvable:$true] %s116
      %s118 = sshll.u32 %s107, 4
      %s119 = int_to_ptr.vmem [resolvable:$true] %s118
      %121 = dma.hbm_to_vmem [thread:$0]  %s117, 16, %s119, %s108
      %s122 = sld [smem:[#allocation5 + $0x5]]
      %s123 = scalar_lea.hbm %s1, %s122
      %s124 = scalar_lea.vmem [#allocation2], 5
      %s125 = scalar_lea.sflag [#allocation3], 5
      // Predicated region
      $region34: #{tpu_custom_call.1} parent=12 // pred_check
        _
      $region35: #{tpu_custom_call.1} parent=12 // pred_check_branch
        %127 = sbr.rel target = $region37
      $region36: #{tpu_custom_call.1} parent=12 // pred_region
        %128 = sst [smem:[#allocation12]] [#allocation23]
        %129 = sst [smem:[#allocation13]] [#allocation22]
      $region37: #{tpu_custom_call.1} parent=12 // pred_fallthru
        _
      %131 = shalt.err (0)
      %s133 = sshll.u32 %s123, 4
      %s134 = int_to_ptr.hbm [resolvable:$true] %s133
      %s135 = sshll.u32 %s124, 4
      %s136 = int_to_ptr.vmem [resolvable:$true] %s135
      %138 = dma.hbm_to_vmem [thread:$0]  %s134, 16, %s136, %s125
      %s139 = sld [smem:[#allocation5 + $0x6]]
      %s140 = scalar_lea.hbm %s1, %s139
      %s141 = scalar_lea.vmem [#allocation2], 6
      %s142 = scalar_lea.sflag [#allocation3], 6
      // Predicated region
      $region38: #{tpu_custom_call.1} parent=12 // pred_check
        _
      $region39: #{tpu_custom_call.1} parent=12 // pred_check_branch
        %144 = sbr.rel target = $region41
      $region40: #{tpu_custom_call.1} parent=12 // pred_region
        %145 = sst [smem:[#allocation12]] [#allocation25]
        %146 = sst [smem:[#allocation13]] [#allocation24]
      $region41: #{tpu_custom_call.1} parent=12 // pred_fallthru
        _
      %148 = shalt.err (0)
      %s150 = sshll.u32 %s140, 4
      %s151 = int_to_ptr.hbm [resolvable:$true] %s150
      %s152 = sshll.u32 %s141, 4
      %s153 = int_to_ptr.vmem [resolvable:$true] %s152
      %155 = dma.hbm_to_vmem [thread:$0]  %s151, 16, %s153, %s142
      %s156 = sld [smem:[#allocation5 + $0x7]]
      %s157 = scalar_lea.hbm %s1, %s156
      %s158 = scalar_lea.vmem [#allocation2], 7
      %s159 = scalar_lea.sflag [#allocation3], 7
      // Predicated region
      $region42: #{tpu_custom_call.1} parent=12 // pred_check
        _
      $region43: #{tpu_custom_call.1} parent=12 // pred_check_branch
        %161 = sbr.rel target = $region45
      $region44: #{tpu_custom_call.1} parent=12 // pred_region
        %162 = sst [smem:[#allocation12]] [#allocation27]
        %163 = sst [smem:[#allocation13]] [#allocation26]
      $region45: #{tpu_custom_call.1} parent=12 // pred_fallthru
        _
      %165 = shalt.err (0)
      %s167 = sshll.u32 %s157, 4
      %s168 = int_to_ptr.hbm [resolvable:$true] %s167
      %s169 = sshll.u32 %s158, 4
      %s170 = int_to_ptr.vmem [resolvable:$true] %s169
      %172 = dma.hbm_to_vmem [thread:$0]  %s168, 16, %s170, %s159
      %s173 = smul.u32 1, 1
      %s174 = sshll.u32 %s173, 4
      %175 = dma.done [#allocation3], %s174
      %s176 = sshll.u32 %s173, 4
      %177 = dma.done %s57, %s176
      %s178 = sshll.u32 %s173, 4
      %179 = dma.done %s74, %s178
      %s180 = sshll.u32 %s173, 4
      %181 = dma.done %s91, %s180
      %s182 = sshll.u32 %s173, 4
      %183 = dma.done %s108, %s182
      %s184 = sshll.u32 %s173, 4
      %185 = dma.done %s125, %s184
      %s186 = sshll.u32 %s173, 4
      %187 = dma.done %s142, %s186
      %s188 = sshll.u32 %s173, 4
      %189 = dma.done %s159, %s188
    $region13: #{tpu_custom_call.1} parent=1 // pred_fallthru
      _
    %v190 = vld [vmem:[#allocation2] sm:$0xff]
    %v191 = vpack.c.bf16 %v190, %v190
    %v192 = vld [vmem:[#allocation6] sm:$0xff]
    %v193 = vld [vmem:[#allocation6 + $0x8] sm:$0xff]
    %v194 = vld [vmem:[#allocation6 + $0x10] sm:$0xff]
    %v195 = vld [vmem:[#allocation6 + $0x18] sm:$0xff]
    %v196 = vld [vmem:[#allocation6 + $0x20] sm:$0xff]
    %v197 = vld [vmem:[#allocation6 + $0x28] sm:$0xff]
    %v198 = vld [vmem:[#allocation6 + $0x30] sm:$0xff]
    %v199 = vld [vmem:[#allocation6 + $0x38] sm:$0xff]
    %v200 = vld [vmem:[#allocation6 + $0x40] sm:$0xff]
    %v201 = vld [vmem:[#allocation6 + $0x48] sm:$0xff]
    %v202 = vld [vmem:[#allocation6 + $0x50] sm:$0xff]
    %v203 = vld [vmem:[#allocation6 + $0x58] sm:$0xff]
    %v204 = vld [vmem:[#allocation6 + $0x60] sm:$0xff]
    %v205 = vld [vmem:[#allocation6 + $0x68] sm:$0xff]
    %v206 = vld [vmem:[#allocation6 + $0x70] sm:$0xff]
    %v207 = vld [vmem:[#allocation6 + $0x78] sm:$0xff]
    %v208 = vld [vmem:[#allocation6 + $0x80] sm:$0xff]
    %v209 = vld [vmem:[#allocation6 + $0x88] sm:$0xff]
    %v210 = vld [vmem:[#allocation6 + $0x90] sm:$0xff]
    %v211 = vld [vmem:[#allocation6 + $0x98] sm:$0xff]
    %v212 = vld [vmem:[#allocation6 + $0xa0] sm:$0xff]
    %v213 = vld [vmem:[#allocation6 + $0xa8] sm:$0xff]
    %v214 = vld [vmem:[#allocation6 + $0xb0] sm:$0xff]
    %v215 = vld [vmem:[#allocation6 + $0xb8] sm:$0xff]
    %v216 = vld [vmem:[#allocation6 + $0xc0] sm:$0xff]
    %v217 = vld [vmem:[#allocation6 + $0xc8] sm:$0xff]
    %v218 = vld [vmem:[#allocation6 + $0xd0] sm:$0xff]
    %v219 = vld [vmem:[#allocation6 + $0xd8] sm:$0xff]
    %v220 = vld [vmem:[#allocation6 + $0xe0] sm:$0xff]
    %v221 = vld [vmem:[#allocation6 + $0xe8] sm:$0xff]
    %v222 = vld [vmem:[#allocation6 + $0xf0] sm:$0xff]
    %v223 = vld [vmem:[#allocation6 + $0xf8] sm:$0xff]
    %v224 = vld [vmem:[#allocation6 + $0x100] sm:$0xff]
    %v225 = vld [vmem:[#allocation6 + $0x108] sm:$0xff]
    %v226 = vld [vmem:[#allocation6 + $0x110] sm:$0xff]
    %v227 = vld [vmem:[#allocation6 + $0x118] sm:$0xff]
    %v228 = vld [vmem:[#allocation6 + $0x120] sm:$0xff]
    %v229 = vld [vmem:[#allocation6 + $0x128] sm:$0xff]
    %v230 = vld [vmem:[#allocation6 + $0x130] sm:$0xff]
    %v231 = vld [vmem:[#allocation6 + $0x138] sm:$0xff]
    %v232 = vld [vmem:[#allocation6 + $0x140] sm:$0xff]
    %v233 = vld [vmem:[#allocation6 + $0x148] sm:$0xff]
    %v234 = vld [vmem:[#allocation6 + $0x150] sm:$0xff]
    %v235 = vld [vmem:[#allocation6 + $0x158] sm:$0xff]
    %v236 = vld [vmem:[#allocation6 + $0x160] sm:$0xff]
    %v237 = vld [vmem:[#allocation6 + $0x168] sm:$0xff]
    %v238 = vld [vmem:[#allocation6 + $0x170] sm:$0xff]
    %v239 = vld [vmem:[#allocation6 + $0x178] sm:$0xff]
    %v240 = vld [vmem:[#allocation6 + $0x180] sm:$0xff]
    %v241 = vld [vmem:[#allocation6 + $0x188] sm:$0xff]
    %v242 = vld [vmem:[#allocation6 + $0x190] sm:$0xff]
    %v243 = vld [vmem:[#allocation6 + $0x198] sm:$0xff]
    %v244 = vld [vmem:[#allocation6 + $0x1a0] sm:$0xff]
    %v245 = vld [vmem:[#allocation6 + $0x1a8] sm:$0xff]
    %v246 = vld [vmem:[#allocation6 + $0x1b0] sm:$0xff]
    %v247 = vld [vmem:[#allocation6 + $0x1b8] sm:$0xff]
    %v248 = vld [vmem:[#allocation6 + $0x1c0] sm:$0xff]
    %v249 = vld [vmem:[#allocation6 + $0x1c8] sm:$0xff]
    %v250 = vld [vmem:[#allocation6 + $0x1d0] sm:$0xff]
    %v251 = vld [vmem:[#allocation6 + $0x1d8] sm:$0xff]
    %v252 = vld [vmem:[#allocation6 + $0x1e0] sm:$0xff]
    %v253 = vld [vmem:[#allocation6 + $0x1e8] sm:$0xff]
    %v254 = vld [vmem:[#allocation6 + $0x1f0] sm:$0xff]
    %v255 = vld [vmem:[#allocation6 + $0x1f8] sm:$0xff]
    %v320 = vunpack.c.l.b16 %v192
    %v321 = vunpack.c.h.b16 %v192
    %v322 = vunpack.c.l.b16 %v193
    %v323 = vunpack.c.h.b16 %v193
    %v324 = vunpack.c.l.b16 %v194
    %v325 = vunpack.c.h.b16 %v194
    %v326 = vunpack.c.l.b16 %v195
    %v327 = vunpack.c.h.b16 %v195
    %v328 = vunpack.c.l.b16 %v196
    %v329 = vunpack.c.h.b16 %v196
    %v330 = vunpack.c.l.b16 %v197
    %v331 = vunpack.c.h.b16 %v197
    %v332 = vunpack.c.l.b16 %v198
    %v333 = vunpack.c.h.b16 %v198
    %v334 = vunpack.c.l.b16 %v199
    %v335 = vunpack.c.h.b16 %v199
    %v336 = vunpack.c.l.b16 %v200
    %v337 = vunpack.c.h.b16 %v200
    %v338 = vunpack.c.l.b16 %v201
    %v339 = vunpack.c.h.b16 %v201
    %v340 = vunpack.c.l.b16 %v202
    %v341 = vunpack.c.h.b16 %v202
    %v342 = vunpack.c.l.b16 %v203
    %v343 = vunpack.c.h.b16 %v203
    %v344 = vunpack.c.l.b16 %v204
    %v345 = vunpack.c.h.b16 %v204
    %v346 = vunpack.c.l.b16 %v205
    %v347 = vunpack.c.h.b16 %v205
    %v348 = vunpack.c.l.b16 %v206
    %v349 = vunpack.c.h.b16 %v206
    %v350 = vunpack.c.l.b16 %v207
    %v351 = vunpack.c.h.b16 %v207
    %v352 = vunpack.c.l.b16 %v208
    %v353 = vunpack.c.h.b16 %v208
    %v354 = vunpack.c.l.b16 %v209
    %v355 = vunpack.c.h.b16 %v209
    %v356 = vunpack.c.l.b16 %v210
    %v357 = vunpack.c.h.b16 %v210
    %v358 = vunpack.c.l.b16 %v211
    %v359 = vunpack.c.h.b16 %v211
    %v360 = vunpack.c.l.b16 %v212
    %v361 = vunpack.c.h.b16 %v212
    %v362 = vunpack.c.l.b16 %v213
    %v363 = vunpack.c.h.b16 %v213
    %v364 = vunpack.c.l.b16 %v214
    %v365 = vunpack.c.h.b16 %v214
    %v366 = vunpack.c.l.b16 %v215
    %v367 = vunpack.c.h.b16 %v215
    %v368 = vunpack.c.l.b16 %v216
    %v369 = vunpack.c.h.b16 %v216
    %v370 = vunpack.c.l.b16 %v217
    %v371 = vunpack.c.h.b16 %v217
    %v372 = vunpack.c.l.b16 %v218
    %v373 = vunpack.c.h.b16 %v218
    %v374 = vunpack.c.l.b16 %v219
    %v375 = vunpack.c.h.b16 %v219
    %v376 = vunpack.c.l.b16 %v220
    %v377 = vunpack.c.h.b16 %v220
    %v378 = vunpack.c.l.b16 %v221
    %v379 = vunpack.c.h.b16 %v221
    %v380 = vunpack.c.l.b16 %v222
    %v381 = vunpack.c.h.b16 %v222
    %v382 = vunpack.c.l.b16 %v223
    %v383 = vunpack.c.h.b16 %v223
    %v384 = vunpack.c.l.b16 %v224
    %v385 = vunpack.c.h.b16 %v224
    %v386 = vunpack.c.l.b16 %v225
    %v387 = vunpack.c.h.b16 %v225
    %v388 = vunpack.c.l.b16 %v226
    %v389 = vunpack.c.h.b16 %v226
    %v390 = vunpack.c.l.b16 %v227
    %v391 = vunpack.c.h.b16 %v227
    %v392 = vunpack.c.l.b16 %v228
    %v393 = vunpack.c.h.b16 %v228
    %v394 = vunpack.c.l.b16 %v229
    %v395 = vunpack.c.h.b16 %v229
    %v396 = vunpack.c.l.b16 %v230
    %v397 = vunpack.c.h.b16 %v230
    %v398 = vunpack.c.l.b16 %v231
    %v399 = vunpack.c.h.b16 %v231
    %v400 = vunpack.c.l.b16 %v232
    %v401 = vunpack.c.h.b16 %v232
    %v402 = vunpack.c.l.b16 %v233
    %v403 = vunpack.c.h.b16 %v233
    %v404 = vunpack.c.l.b16 %v234
    %v405 = vunpack.c.h.b16 %v234
    %v406 = vunpack.c.l.b16 %v235
    %v407 = vunpack.c.h.b16 %v235
    %v408 = vunpack.c.l.b16 %v236
    %v409 = vunpack.c.h.b16 %v236
    %v410 = vunpack.c.l.b16 %v237
    %v411 = vunpack.c.h.b16 %v237
    %v412 = vunpack.c.l.b16 %v238
    %v413 = vunpack.c.h.b16 %v238
    %v414 = vunpack.c.l.b16 %v239
    %v415 = vunpack.c.h.b16 %v239
    %v416 = vunpack.c.l.b16 %v240
    %v417 = vunpack.c.h.b16 %v240
    %v418 = vunpack.c.l.b16 %v241
    %v419 = vunpack.c.h.b16 %v241
    %v420 = vunpack.c.l.b16 %v242
    %v421 = vunpack.c.h.b16 %v242
    %v422 = vunpack.c.l.b16 %v243
    %v423 = vunpack.c.h.b16 %v243
    %v424 = vunpack.c.l.b16 %v244
    %v425 = vunpack.c.h.b16 %v244
    %v426 = vunpack.c.l.b16 %v245
    %v427 = vunpack.c.h.b16 %v245
    %v428 = vunpack.c.l.b16 %v246
    %v429 = vunpack.c.h.b16 %v246
    %v430 = vunpack.c.l.b16 %v247
    %v431 = vunpack.c.h.b16 %v247
    %v432 = vunpack.c.l.b16 %v248
    %v433 = vunpack.c.h.b16 %v248
    %v434 = vunpack.c.l.b16 %v249
    %v435 = vunpack.c.h.b16 %v249
    %v436 = vunpack.c.l.b16 %v250
    %v437 = vunpack.c.h.b16 %v250
    %v438 = vunpack.c.l.b16 %v251
    %v439 = vunpack.c.h.b16 %v251
    %v440 = vunpack.c.l.b16 %v252
    %v441 = vunpack.c.h.b16 %v252
    %v442 = vunpack.c.l.b16 %v253
    %v443 = vunpack.c.h.b16 %v253
    %v444 = vunpack.c.l.b16 %v254
    %v445 = vunpack.c.h.b16 %v254
    %v446 = vunpack.c.l.b16 %v255
    %v447 = vunpack.c.h.b16 %v255
    %v448 = vpack.c.b16 %v328, %v320
    %v449 = vpack.c.b16 %v329, %v321
    %v450 = vpack.c.b16 %v330, %v322
    %v451 = vpack.c.b16 %v331, %v323
    %v452 = vpack.c.b16 %v332, %v324
    %v453 = vpack.c.b16 %v333, %v325
    %v454 = vpack.c.b16 %v334, %v326
    %v455 = vpack.c.b16 %v335, %v327
    %v456 = vpack.c.b16 %v344, %v336
    %v457 = vpack.c.b16 %v345, %v337
    %v458 = vpack.c.b16 %v346, %v338
    %v459 = vpack.c.b16 %v347, %v339
    %v460 = vpack.c.b16 %v348, %v340
    %v461 = vpack.c.b16 %v349, %v341
    %v462 = vpack.c.b16 %v350, %v342
    %v463 = vpack.c.b16 %v351, %v343
    %v464 = vpack.c.b16 %v360, %v352
    %v465 = vpack.c.b16 %v361, %v353
    %v466 = vpack.c.b16 %v362, %v354
    %v467 = vpack.c.b16 %v363, %v355
    %v468 = vpack.c.b16 %v364, %v356
    %v469 = vpack.c.b16 %v365, %v357
    %v470 = vpack.c.b16 %v366, %v358
    %v471 = vpack.c.b16 %v367, %v359
    %v472 = vpack.c.b16 %v376, %v368
    %v473 = vpack.c.b16 %v377, %v369
    %v474 = vpack.c.b16 %v378, %v370
    %v475 = vpack.c.b16 %v379, %v371
    %v476 = vpack.c.b16 %v380, %v372
    %v477 = vpack.c.b16 %v381, %v373
    %v478 = vpack.c.b16 %v382, %v374
    %v479 = vpack.c.b16 %v383, %v375
    %v480 = vpack.c.b16 %v392, %v384
    %v481 = vpack.c.b16 %v393, %v385
    %v482 = vpack.c.b16 %v394, %v386
    %v483 = vpack.c.b16 %v395, %v387
    %v484 = vpack.c.b16 %v396, %v388
    %v485 = vpack.c.b16 %v397, %v389
    %v486 = vpack.c.b16 %v398, %v390
    %v487 = vpack.c.b16 %v399, %v391
    %v488 = vpack.c.b16 %v408, %v400
    %v489 = vpack.c.b16 %v409, %v401
    %v490 = vpack.c.b16 %v410, %v402
    %v491 = vpack.c.b16 %v411, %v403
    %v492 = vpack.c.b16 %v412, %v404
    %v493 = vpack.c.b16 %v413, %v405
    %v494 = vpack.c.b16 %v414, %v406
    %v495 = vpack.c.b16 %v415, %v407
    %v496 = vpack.c.b16 %v424, %v416
    %v497 = vpack.c.b16 %v425, %v417
    %v498 = vpack.c.b16 %v426, %v418
    %v499 = vpack.c.b16 %v427, %v419
    %v500 = vpack.c.b16 %v428, %v420
    %v501 = vpack.c.b16 %v429, %v421
    %v502 = vpack.c.b16 %v430, %v422
    %v503 = vpack.c.b16 %v431, %v423
    %v504 = vpack.c.b16 %v440, %v432
    %v505 = vpack.c.b16 %v441, %v433
    %v506 = vpack.c.b16 %v442, %v434
    %v507 = vpack.c.b16 %v443, %v435
    %v508 = vpack.c.b16 %v444, %v436
    %v509 = vpack.c.b16 %v445, %v437
    %v510 = vpack.c.b16 %v446, %v438
    %v511 = vpack.c.b16 %v447, %v439
    %576 = vmatpush.bf16.msra.mxu0 %v504
    %577 = vmatpush.bf16.msra.mxu0 %v496
    %578 = vmatpush.bf16.msra.mxu0 %v488
    %579 = vmatpush.bf16.msra.mxu0 %v480
    %580 = vmatpush.bf16.msra.mxu0 %v472
    %581 = vmatpush.bf16.msra.mxu0 %v464
    %582 = vmatpush.bf16.msra.mxu0 %v456
    %583 = vmatpush.bf16.msra.mxu0 %v448
    %584 = vmatmul.bf16.gmra.mxu0 %v191
    %v585 = vpop.f32.mrf.mxu0
    %v586 = vadd.f32 0.0, %v585
    %v587 = vpop.f32.mrf.mxu0
    %588 = vdwg.mxu0
    %589 = vmatpush.bf16.msra.mxu0 %v505
    %590 = vmatpush.bf16.msra.mxu0 %v497
    %591 = vmatpush.bf16.msra.mxu0 %v489
    %592 = vmatpush.bf16.msra.mxu0 %v481
    %593 = vmatpush.bf16.msra.mxu0 %v473
    %594 = vmatpush.bf16.msra.mxu0 %v465
    %595 = vmatpush.bf16.msra.mxu0 %v457
    %596 = vmatpush.bf16.msra.mxu0 %v449
    %597 = vmatmul.bf16.gmra.mxu0 %v191
    %v598 = vpop.f32.mrf.mxu0
    %v599 = vadd.f32 0.0, %v598
    %v600 = vpop.f32.mrf.mxu0
    %601 = vdwg.mxu0
    %602 = vmatpush.bf16.msra.mxu0 %v506
    %603 = vmatpush.bf16.msra.mxu0 %v498
    %604 = vmatpush.bf16.msra.mxu0 %v490
    %605 = vmatpush.bf16.msra.mxu0 %v482
    %606 = vmatpush.bf16.msra.mxu0 %v474
    %607 = vmatpush.bf16.msra.mxu0 %v466
    %608 = vmatpush.bf16.msra.mxu0 %v458
    %609 = vmatpush.bf16.msra.mxu0 %v450
    %610 = vmatmul.bf16.gmra.mxu0 %v191
    %v611 = vpop.f32.mrf.mxu0
    %v612 = vadd.f32 0.0, %v611
    %v613 = vpop.f32.mrf.mxu0
    %614 = vdwg.mxu0
    %615 = vmatpush.bf16.msra.mxu0 %v507
    %616 = vmatpush.bf16.msra.mxu0 %v499
    %617 = vmatpush.bf16.msra.mxu0 %v491
    %618 = vmatpush.bf16.msra.mxu0 %v483
    %619 = vmatpush.bf16.msra.mxu0 %v475
    %620 = vmatpush.bf16.msra.mxu0 %v467
    %621 = vmatpush.bf16.msra.mxu0 %v459
    %622 = vmatpush.bf16.msra.mxu0 %v451
    %623 = vmatmul.bf16.gmra.mxu0 %v191
    %v624 = vpop.f32.mrf.mxu0
    %v625 = vadd.f32 0.0, %v624
    %v626 = vpop.f32.mrf.mxu0
    %627 = vdwg.mxu0
    %628 = vmatpush.bf16.msra.mxu0 %v508
    %629 = vmatpush.bf16.msra.mxu0 %v500
    %630 = vmatpush.bf16.msra.mxu0 %v492
    %631 = vmatpush.bf16.msra.mxu0 %v484
    %632 = vmatpush.bf16.msra.mxu0 %v476
    %633 = vmatpush.bf16.msra.mxu0 %v468
    %634 = vmatpush.bf16.msra.mxu0 %v460
    %635 = vmatpush.bf16.msra.mxu0 %v452
    %636 = vmatmul.bf16.gmra.mxu0 %v191
    %v637 = vpop.f32.mrf.mxu0
    %v638 = vadd.f32 0.0, %v637
    %v639 = vpop.f32.mrf.mxu0
    %640 = vdwg.mxu0
    %641 = vmatpush.bf16.msra.mxu0 %v509
    %642 = vmatpush.bf16.msra.mxu0 %v501
    %643 = vmatpush.bf16.msra.mxu0 %v493
    %644 = vmatpush.bf16.msra.mxu0 %v485
    %645 = vmatpush.bf16.msra.mxu0 %v477
    %646 = vmatpush.bf16.msra.mxu0 %v469
    %647 = vmatpush.bf16.msra.mxu0 %v461
    %648 = vmatpush.bf16.msra.mxu0 %v453
    %649 = vmatmul.bf16.gmra.mxu0 %v191
    %v650 = vpop.f32.mrf.mxu0
    %v651 = vadd.f32 0.0, %v650
    %v652 = vpop.f32.mrf.mxu0
    %653 = vdwg.mxu0
    %654 = vmatpush.bf16.msra.mxu0 %v510
    %655 = vmatpush.bf16.msra.mxu0 %v502
    %656 = vmatpush.bf16.msra.mxu0 %v494
    %657 = vmatpush.bf16.msra.mxu0 %v486
    %658 = vmatpush.bf16.msra.mxu0 %v478
    %659 = vmatpush.bf16.msra.mxu0 %v470
    %660 = vmatpush.bf16.msra.mxu0 %v462
    %661 = vmatpush.bf16.msra.mxu0 %v454
    %662 = vmatmul.bf16.gmra.mxu0 %v191
    %v663 = vpop.f32.mrf.mxu0
    %v664 = vadd.f32 0.0, %v663
    %v665 = vpop.f32.mrf.mxu0
    %666 = vdwg.mxu0
    %667 = vmatpush.bf16.msra.mxu0 %v511
    %668 = vmatpush.bf16.msra.mxu0 %v503
    %669 = vmatpush.bf16.msra.mxu0 %v495
    %670 = vmatpush.bf16.msra.mxu0 %v487
    %671 = vmatpush.bf16.msra.mxu0 %v479
    %672 = vmatpush.bf16.msra.mxu0 %v471
    %673 = vmatpush.bf16.msra.mxu0 %v463
    %674 = vmatpush.bf16.msra.mxu0 %v455
    %675 = vmatmul.bf16.gmra.mxu0 %v191
    %v676 = vpop.f32.mrf.mxu0
    %v677 = vadd.f32 0.0, %v676
    %v678 = vpop.f32.mrf.mxu0
    %679 = vdwg.mxu0
    %680 = vst [vmem:[#allocation9] sm:$0xff] %v586
    %681 = vst [vmem:[#allocation9 + $0x8] sm:$0xff] %v599
    %682 = vst [vmem:[#allocation9 + $0x10] sm:$0xff] %v612
    %683 = vst [vmem:[#allocation9 + $0x18] sm:$0xff] %v625
    %684 = vst [vmem:[#allocation9 + $0x20] sm:$0xff] %v638
    %685 = vst [vmem:[#allocation9 + $0x28] sm:$0xff] %v651
    %686 = vst [vmem:[#allocation9 + $0x30] sm:$0xff] %v664
    %687 = vst [vmem:[#allocation9 + $0x38] sm:$0xff] %v677
    // Predicated region
    $region46: #{tpu_custom_call.1} parent=1 // pred_check
      _
    $region47: #{tpu_custom_call.1} parent=1 // pred_check_branch
      %689 = sbr.rel (0) target = $region49
    $region48: #{tpu_custom_call.1} parent=1 // pred_region
      %691 = vsyncadd [#allocation8], 0
      %s693 = sshll.u32 [#allocation9], 4
      %s694 = int_to_ptr.vmem [resolvable:$true] %s693
      %s695 = sshll.u32 %s3, 4
      %s696 = int_to_ptr.hbm [resolvable:$true] %s695
      %698 = dma.vmem_to_hbm [thread:$0]  %s694, 1024, %s696, [#allocation8]
    $region49: #{tpu_custom_call.1} parent=1 // pred_fallthru
      _
    // Predicated region
    $region50: #{tpu_custom_call.1} parent=1 // pred_check
      _
    $region51: #{tpu_custom_call.1} parent=1 // pred_check_branch
      %700 = sbr.rel (0) target = $region53
    $region52: #{tpu_custom_call.1} parent=1 // pred_region
      %702 = dma.done [#allocation8], 1024
    $region53: #{tpu_custom_call.1} parent=1 // pred_fallthru
      _
    %703 = vsyncpa [#allocation7], 1
    %704 = vsyncpa [#allocation8], 1
  %705 = vsyncmov [#allocation3]
  %s706 = vpop.sfrf %705
  %p707 = scmp.eq.s32.totalorder %s706, 0
  %p708 = pneg %p707
  %710 = shalt.err (%p708)
  %s711 = scalar_lea.sflag [#allocation3], 1
  %712 = vsyncmov %s711
  %s713 = vpop.sfrf %712
  %p714 = scmp.eq.s32.totalorder %s713, 0
  %p715 = pneg %p714
  %717 = shalt.err (%p715)
  %s718 = scalar_lea.sflag [#allocation3], 2
  %719 = vsyncmov %s718
  %s720 = vpop.sfrf %719
  %p721 = scmp.eq.s32.totalorder %s720, 0
  %p722 = pneg %p721
  %724 = shalt.err (%p722)
  %s725 = scalar_lea.sflag [#allocation3], 3
  %726 = vsyncmov %s725
  %s727 = vpop.sfrf %726
  %p728 = scmp.eq.s32.totalorder %s727, 0
  %p729 = pneg %p728
  %731 = shalt.err (%p729)
  %s732 = scalar_lea.sflag [#allocation3], 4
  %733 = vsyncmov %s732
  %s734 = vpop.sfrf %733
  %p735 = scmp.eq.s32.totalorder %s734, 0
  %p736 = pneg %p735
  %738 = shalt.err (%p736)
  %s739 = scalar_lea.sflag [#allocation3], 5
  %740 = vsyncmov %s739
  %s741 = vpop.sfrf %740
  %p742 = scmp.eq.s32.totalorder %s741, 0
  %p743 = pneg %p742
  %745 = shalt.err (%p743)
  %s746 = scalar_lea.sflag [#allocation3], 6
  %747 = vsyncmov %s746
  %s748 = vpop.sfrf %747
  %p749 = scmp.eq.s32.totalorder %s748, 0
  %p750 = pneg %p749
  %752 = shalt.err (%p750)
  %s753 = scalar_lea.sflag [#allocation3], 7
  %754 = vsyncmov %s753
  %s755 = vpop.sfrf %754
  %p756 = scmp.eq.s32.totalorder %s755, 0
  %p757 = pneg %p756
  %759 = shalt.err (%p757)

</llo_original>
